<compile_context>
chip_gen: v5e
topology: v5e:2x2
jax: 0.10.0
libtpu: 0.0.40
codegen_flags: <defaults>
</compile_context>

<pallas_src>
import functools

import jax
import jax.numpy as jnp
from jax.experimental import pallas as pl
from jax.experimental.pallas import tpu as pltpu


def _round_up(x, m):
    return (x + m - 1) // m * m


def _vmem_budget_bytes(tb, k, h, o):
    """Conservative VMEM estimate for one grid step (double-buffered I/O)."""
    weights = (k * h + h * o) * 2              # bf16 W1, W2 (resident once)
    biases = 8 * (h + o) * 4                   # (1,H)/(1,O) f32, sublane-pad to 8
    io = 2 * tb * k * 2 + 2 * tb * o * 4       # 2x x-tile (bf16) + 2x out-tile (f32)
    interm = tb * h * 4 + tb * o * 4           # hidden + logits live in f32
    return weights + biases + io + interm


def mlp2_kernel(x_ref, w1_ref, b1_ref, w2_ref, b2_ref, o_ref, *, dim_out):
    # hidden = relu(x @ W1 + b1), MXU in bf16, accumulate + elementwise in f32
    h = jnp.dot(x_ref[...], w1_ref[...], preferred_element_type=jnp.float32)
    h = jnp.maximum(h + b1_ref[...], 0.0)

    # logits = h @ W2 + b2 (cast hidden to bf16 right before the second matmul)
    logits = jnp.dot(h.astype(w2_ref.dtype), w2_ref[...],
                     preferred_element_type=jnp.float32)
    logits = logits + b2_ref[...]

    # Mask zero-padded output columns so they don't perturb the softmax sum.
    o_pad = logits.shape[-1]
    if dim_out < o_pad:
        col = jax.lax.broadcasted_iota(jnp.int32, logits.shape, 1)
        logits = jnp.where(col < dim_out, logits, jnp.float32(-1e30))

    # Numerically stable log-softmax along the last axis (PyTorch dim=1).
    m = jnp.max(logits, axis=-1, keepdims=True)
    shifted = logits - m
    lse = jnp.log(jnp.sum(jnp.exp(shifted), axis=-1, keepdims=True))
    o_ref[...] = (shifted - lse).astype(o_ref.dtype)


def mlp2_forward(x, w1, b1, w2, b2, *, tb_max=512, vmem_target=40 << 20):
    B, dim_in = x.shape
    dim_hidden = w1.shape[1]
    dim_out = w2.shape[1]

    # Pad lane dims to 128 multiples (dense MXU tiles, lane-dense output store).
    k_pad = _round_up(dim_in, 128)
    h_pad = _round_up(dim_hidden, 128)
    o_pad = _round_up(dim_out, 128)

    # Pick the batch tile: as large as possible, shrunk to fit a conservative
    # VMEM budget (v7x has 64 MiB per TensorCore).
    tb = min(tb_max, _round_up(B, 8))
    while tb > 8 and _vmem_budget_bytes(tb, k_pad, h_pad, o_pad) > vmem_target:
        tb = max(8, tb // 2)
    b_pad = _round_up(B, tb)
    n_blocks = b_pad // tb

    # Zero-pad parameters / input; bf16 for MXU operands, f32 for biases.
    w1p = jnp.pad(w1.astype(jnp.bfloat16),
                  ((0, k_pad - dim_in), (0, h_pad - dim_hidden)))
    b1p = jnp.pad(b1.astype(jnp.float32), ((0, 0), (0, h_pad - dim_hidden)))
    w2p = jnp.pad(w2.astype(jnp.bfloat16),
                  ((0, h_pad - dim_hidden), (0, o_pad - dim_out)))
    b2p = jnp.pad(b2.astype(jnp.float32), ((0, 0), (0, o_pad - dim_out)))
    x_p = jnp.pad(x.astype(jnp.bfloat16),
                  ((0, b_pad - B), (0, k_pad - dim_in)))

    budget = _vmem_budget_bytes(tb, k_pad, h_pad, o_pad)
    vmem_limit = int(min(64 << 20, max(16 << 20, budget + (4 << 20))))

    cost = pl.CostEstimate(
        flops=int(2 * b_pad * (k_pad * h_pad + h_pad * o_pad)),
        transcendentals=int(b_pad * (o_pad + 1)),
        bytes_accessed=int(x_p.size * 2 + w1p.size * 2 + w2p.size * 2
                           + b1p.size * 4 + b2p.size * 4 + b_pad * o_pad * 4),
    )

    out_padded = pl.pallas_call(
        functools.partial(mlp2_kernel, dim_out=dim_out),
        out_shape=jax.ShapeDtypeStruct((b_pad, o_pad), jnp.float32),
        grid=(n_blocks,),
        in_specs=[
            pl.BlockSpec((tb, k_pad), lambda i: (i, 0)),      # x tile streams
            pl.BlockSpec((k_pad, h_pad), lambda i: (0, 0)),   # W1 resident
            pl.BlockSpec((1, h_pad), lambda i: (0, 0)),       # b1 resident
            pl.BlockSpec((h_pad, o_pad), lambda i: (0, 0)),   # W2 resident
            pl.BlockSpec((1, o_pad), lambda i: (0, 0)),       # b2 resident
        ],
        out_specs=pl.BlockSpec((tb, o_pad), lambda i: (i, 0)),
        compiler_params=pltpu.CompilerParams(
            dimension_semantics=("parallel",),                # v7x: 2 TCs
            vmem_limit_bytes=vmem_limit,
        ),
        cost_estimate=cost,
    )(x_p, w1p, b1p, w2p, b2p)

    # Slice away the batch / output-lane padding.
    return out_padded[:B, :dim_out]


def init_params(key, dim_in, dim_hidden, dim_out):
    # Deterministic init mimicking nn.Linear's uniform(-1/sqrt(fan_in), 1/sqrt(fan_in)).
    k1, k2, k3, k4 = jax.random.split(key, 4)
    lim1 = 1.0 / (dim_in ** 0.5)
    lim2 = 1.0 / (dim_hidden ** 0.5)
    w1 = jax.random.uniform(k1, (dim_in, dim_hidden), jnp.float32, -lim1, lim1)
    b1 = jax.random.uniform(k2, (1, dim_hidden), jnp.float32, -lim1, lim1)
    w2 = jax.random.uniform(k3, (dim_hidden, dim_out), jnp.float32, -lim2, lim2)
    b2 = jax.random.uniform(k4, (1, dim_out), jnp.float32, -lim2, lim2)
    return w1, b1, w2, b2


def mlp2_reference(x, w1, b1, w2, b2):
    # Mixed-precision reference matching the kernel's bf16-MXU / f32-accumulate path.
    h = jnp.dot(x.astype(jnp.bfloat16), w1.astype(jnp.bfloat16),
                preferred_element_type=jnp.float32) + b1
    h = jnp.maximum(h, 0.0)
    logits = jnp.dot(h.astype(jnp.bfloat16), w2.astype(jnp.bfloat16),
                     preferred_element_type=jnp.float32) + b2
    return jax.nn.log_softmax(logits, axis=-1)


if __name__ == "__main__":
    key = jax.random.PRNGKey(0)
    kx, kp = jax.random.split(key)

    B, dim_in, dim_hidden, dim_out = 8, 32, 64, 16
    x = jax.random.normal(kx, (B, dim_in), jnp.float32)
    w1, b1, w2, b2 = init_params(kp, dim_in, dim_hidden, dim_out)

    out = mlp2_forward(x, w1, b1, w2, b2)
    jax.block_until_ready(out)

    ref = mlp2_reference(x, w1, b1, w2, b2)
    assert out.shape == (B, dim_out)
    assert bool(jnp.all(jnp.isfinite(out)))
    max_err = float(jnp.max(jnp.abs(out - ref)))
    assert jnp.allclose(out, ref, atol=1e-3, rtol=1e-3), max_err

    print("KERNEL_OK")
</pallas_src>

<mosaic_0001>
module attributes {stable_mosaic.version = 11 : i64} {
  func.func @mlp2_kernel(%arg0: i32, %arg1: memref<8x128xbf16, #tpu.memory_space<vmem>>, %arg2: memref<128x128xbf16, #tpu.memory_space<vmem>>, %arg3: memref<1x128xf32, #tpu.memory_space<vmem>>, %arg4: memref<128x128xbf16, #tpu.memory_space<vmem>>, %arg5: memref<1x128xf32, #tpu.memory_space<vmem>>, %arg6: memref<8x128xf32, #tpu.memory_space<vmem>>) attributes {dimension_semantics = [#tpu.dimension_semantics<parallel>], iteration_bounds = array<i64: 1>, scalar_prefetch = 0 : i64, scratch_operands = 0 : i64, tpu.core_type = #tpu.core_type<tc>, window_params = [{transform_indices = @transform_0, window_bounds = array<i64: 8, 128>}, {pipeline_mode = #tpu.pipeline_mode<synchronous>, transform_indices = @transform_1, window_bounds = array<i64: 128, 128>}, {pipeline_mode = #tpu.pipeline_mode<synchronous>, transform_indices = @transform_2, window_bounds = array<i64: 1, 128>}, {pipeline_mode = #tpu.pipeline_mode<synchronous>, transform_indices = @transform_3, window_bounds = array<i64: 128, 128>}, {pipeline_mode = #tpu.pipeline_mode<synchronous>, transform_indices = @transform_4, window_bounds = array<i64: 1, 128>}, {transform_indices = @transform_5, window_bounds = array<i64: 8, 128>}]} {
    %c0 = arith.constant 0 : index
    %c0_0 = arith.constant 0 : index
    %0 = vector.load %arg1[%c0, %c0_0] : memref<8x128xbf16, #tpu.memory_space<vmem>>, vector<8x128xbf16>
    %c0_1 = arith.constant 0 : index
    %c0_2 = arith.constant 0 : index
    %1 = vector.load %arg2[%c0_1, %c0_2] : memref<128x128xbf16, #tpu.memory_space<vmem>>, vector<128x128xbf16>
    %cst = arith.constant dense<0.000000e+00> : vector<8x128xf32>
    %2 = tpu.matmul %0, %1, %cst {dimension_numbers = #tpu.dot_dimension_numbers<[1], [0], [0], [1], [0, 0, 1, 1], [], []>} : vector<8x128xbf16>, vector<128x128xbf16>, vector<8x128xf32> -> vector<8x128xf32>
    %c0_3 = arith.constant 0 : index
    %c0_4 = arith.constant 0 : index
    %3 = vector.load %arg3[%c0_3, %c0_4] : memref<1x128xf32, #tpu.memory_space<vmem>>, vector<1x128xf32>
    %4 = vector.broadcast %3 : vector<1x128xf32> to vector<8x128xf32>
    %5 = arith.addf %2, %4 : vector<8x128xf32>
    %cst_5 = arith.constant 0.000000e+00 : f32
    %6 = vector.broadcast %cst_5 : f32 to vector<8x128xf32>
    %7 = arith.maximumf %5, %6 : vector<8x128xf32>
    %8 = arith.truncf %7 : vector<8x128xf32> to vector<8x128xbf16>
    %c0_6 = arith.constant 0 : index
    %c0_7 = arith.constant 0 : index
    %9 = vector.load %arg4[%c0_6, %c0_7] : memref<128x128xbf16, #tpu.memory_space<vmem>>, vector<128x128xbf16>
    %cst_8 = arith.constant dense<0.000000e+00> : vector<8x128xf32>
    %10 = tpu.matmul %8, %9, %cst_8 {dimension_numbers = #tpu.dot_dimension_numbers<[1], [0], [0], [1], [0, 0, 1, 1], [], []>} : vector<8x128xbf16>, vector<128x128xbf16>, vector<8x128xf32> -> vector<8x128xf32>
    %c0_9 = arith.constant 0 : index
    %c0_10 = arith.constant 0 : index
    %11 = vector.load %arg5[%c0_9, %c0_10] : memref<1x128xf32, #tpu.memory_space<vmem>>, vector<1x128xf32>
    %12 = vector.broadcast %11 : vector<1x128xf32> to vector<8x128xf32>
    %13 = arith.addf %10, %12 : vector<8x128xf32>
    %14 = tpu.iota {dimensions = array<i32: 1>} : vector<8x128xi32>
    %c16_i32 = arith.constant 16 : i32
    %15 = vector.broadcast %c16_i32 : i32 to vector<8x128xi32>
    %16 = arith.cmpi slt, %14, %15 : vector<8x128xi32>
    %cst_11 = arith.constant -1.000000e+30 : f32
    %17 = vector.broadcast %cst_11 : f32 to vector<8x128xf32>
    %18 = arith.select %16, %13, %17 : vector<8x128xi1>, vector<8x128xf32>
    %cst_12 = arith.constant dense<0xFF800000> : vector<8xf32>
    %19 = vector.multi_reduction <maximumf>, %18, %cst_12 [1] : vector<8x128xf32> to vector<8xf32>
    %20 = vector.shape_cast %19 : vector<8xf32> to vector<8x1xf32>
    %21 = vector.broadcast %20 : vector<8x1xf32> to vector<8x128xf32>
    %22 = arith.subf %18, %21 : vector<8x128xf32>
    %23 = math.exp %22 : vector<8x128xf32>
    %cst_13 = arith.constant dense<0.000000e+00> : vector<8xf32>
    %24 = vector.multi_reduction <add>, %23, %cst_13 [1] : vector<8x128xf32> to vector<8xf32>
    %25 = vector.shape_cast %24 : vector<8xf32> to vector<8x1xf32>
    %26 = math.log %25 : vector<8x1xf32>
    %27 = vector.broadcast %26 : vector<8x1xf32> to vector<8x128xf32>
    %28 = arith.subf %22, %27 : vector<8x128xf32>
    %c0_14 = arith.constant 0 : index
    %c0_15 = arith.constant 0 : index
    %29 = vector.load %arg6[%c0_14, %c0_15] : memref<8x128xf32, #tpu.memory_space<vmem>>, vector<8x128xf32>
    tpu.vector_store %arg6[%c0_14, %c0_15], %28 {strides = array<i32>} : memref<8x128xf32, #tpu.memory_space<vmem>>, vector<8x128xf32>,
    return
  }
  func.func @transform_0(%arg0: i32) -> (i32, i32) {
    %c0_i32 = arith.constant 0 : i32
    %c0_i32_0 = arith.constant 0 : i32
    return %arg0, %c0_i32 : i32, i32
  }
  func.func @transform_1(%arg0: i32) -> (i32, i32) {
    %c0_i32 = arith.constant 0 : i32
    %c0_i32_0 = arith.constant 0 : i32
    %c0_i32_1 = arith.constant 0 : i32
    return %c0_i32, %c0_i32_0 : i32, i32
  }
  func.func @transform_2(%arg0: i32) -> (i32, i32) {
    %c0_i32 = arith.constant 0 : i32
    %c0_i32_0 = arith.constant 0 : i32
    %c0_i32_1 = arith.constant 0 : i32
    return %c0_i32, %c0_i32_0 : i32, i32
  }
  func.func @transform_3(%arg0: i32) -> (i32, i32) {
    %c0_i32 = arith.constant 0 : i32
    %c0_i32_0 = arith.constant 0 : i32
    %c0_i32_1 = arith.constant 0 : i32
    return %c0_i32, %c0_i32_0 : i32, i32
  }
  func.func @transform_4(%arg0: i32) -> (i32, i32) {
    %c0_i32 = arith.constant 0 : i32
    %c0_i32_0 = arith.constant 0 : i32
    %c0_i32_1 = arith.constant 0 : i32
    return %c0_i32, %c0_i32_0 : i32, i32
  }
  func.func @transform_5(%arg0: i32) -> (i32, i32) {
    %c0_i32 = arith.constant 0 : i32
    %c0_i32_0 = arith.constant 0 : i32
    return %arg0, %c0_i32 : i32, i32
  }
}

</mosaic_0001>

<llo_original>
// kernel: tpu_custom_call.1
$region0: #{tpu_custom_call.1}
  #allocation0 [shape = 'u32[]', space=smem, size = 0x4, offset = 0x4, fixed_abs, tag = 'smem constant byte address 0x4 - core index']
  #allocation1 [shape = 'u32[72,128]{1,0:T(1,128)}', space=vmem, size = 0x9000, scoped, tag = 'internal scratch']
  %s0 = inlined_call_operand.hbm [shape: bf16[8,128], index: 0, kind: input, shape index: {}]
  %s1 = inlined_call_operand.hbm [shape: bf16[128,128], index: 1, kind: input, shape index: {}]
  %s2 = inlined_call_operand.vmem [shape: f32[1,128], index: 2, kind: input, shape index: {}]
  %s3 = inlined_call_operand.hbm [shape: bf16[128,128], index: 3, kind: input, shape index: {}]
  %s4 = inlined_call_operand.vmem [shape: f32[1,128], index: 4, kind: input, shape index: {}]
  %s5 = inlined_call_operand.hbm [shape: f32[8,128], index: 5, kind: output, shape index: {}]
  %s6 = sld [smem:[#allocation0]]
  $region42: #{tpu_custom_call.1} parent=0
    _
  %s8 = ssub.s32 1, %s6
  %s9 = scalar_select 0, %s8, %s6
  $region1: #{tpu_custom_call.1} parent=0
    #allocation2 [shape = 'u8[2048]{0}', space=vmem, size = 0x800, scoped, tag = 'input window, operand 0, single buffered']
    #allocation3 [shape = 's32[1]{0}', space=sflag, size = 0x4, scoped, tag = 'scoped memory for tpu_custom_call.1']
    #allocation4 [shape = 's32[1]{0}', space=sflag, size = 0x4, scoped, tag = 'scoped memory for tpu_custom_call.1']
    #allocation5 [shape = 'u8[32768]{0}', space=vmem, size = 0x8000, scoped, tag = 'input window, operand 1, single buffered']
    #allocation6 [shape = 's32[1]{0}', space=sflag, size = 0x4, scoped, tag = 'scoped memory for tpu_custom_call.1']
    #allocation7 [shape = 'u8[32768]{0}', space=vmem, size = 0x8000, scoped, tag = 'input window, operand 3, single buffered']
    #allocation8 [shape = 'u8[4096]{0}', space=vmem, size = 0x1000, scoped, tag = 'output window, operand 0, single buffered']
    %10 = vsyncpa [#allocation3], 0
    %11 = vsyncpa [#allocation6], 0
    %12 = vsyncpa [#allocation4], 0
    // Predicated region
    $region2: #{tpu_custom_call.1} parent=1 // pred_check
      _
    $region3: #{tpu_custom_call.1} parent=1 // pred_check_branch
      %14 = sbr.rel (0) target = $region5
    $region4: #{tpu_custom_call.1} parent=1 // pred_region
      %16 = vsyncadd [#allocation3], 0
      %s18 = sshll.u32 %s0, 4
      %s19 = int_to_ptr.hbm [resolvable:$true] %s18
      %s20 = sshll.u32 [#allocation2], 4
      %s21 = int_to_ptr.vmem [resolvable:$true] %s20
      %23 = dma.hbm_to_vmem [thread:$0]  %s19, 64, %s21, [#allocation3]
    $region5: #{tpu_custom_call.1} parent=1 // pred_fallthru
      _
    // Predicated region
    $region6: #{tpu_custom_call.1} parent=1 // pred_check
      _
    $region7: #{tpu_custom_call.1} parent=1 // pred_check_branch
      %25 = sbr.rel (0) target = $region9
    $region8: #{tpu_custom_call.1} parent=1 // pred_region
      %27 = vsyncadd [#allocation6], 0
      %s28 = sshll.u32 %s1, 4
      %s29 = int_to_ptr.hbm [resolvable:$true] %s28
      %s30 = sshll.u32 [#allocation5], 4
      %s31 = int_to_ptr.vmem [resolvable:$true] %s30
      %36 = dma.hbm_to_vmem [thread:$0]  %s29, 1024, %s31, [#allocation6], 64, 64, 4
    $region9: #{tpu_custom_call.1} parent=1 // pred_fallthru
      _
    // Predicated region
    $region10: #{tpu_custom_call.1} parent=1 // pred_check
      _
    $region11: #{tpu_custom_call.1} parent=1 // pred_check_branch
      %38 = sbr.rel (0) target = $region13
    $region12: #{tpu_custom_call.1} parent=1 // pred_region
      _
    $region13: #{tpu_custom_call.1} parent=1 // pred_fallthru
      _
    // Predicated region
    $region14: #{tpu_custom_call.1} parent=1 // pred_check
      _
    $region15: #{tpu_custom_call.1} parent=1 // pred_check_branch
      %40 = sbr.rel (0) target = $region17
    $region16: #{tpu_custom_call.1} parent=1 // pred_region
      %42 = vsyncadd [#allocation6], 0
      %s43 = sshll.u32 %s3, 4
      %s44 = int_to_ptr.hbm [resolvable:$true] %s43
      %s45 = sshll.u32 [#allocation7], 4
      %s46 = int_to_ptr.vmem [resolvable:$true] %s45
      %51 = dma.hbm_to_vmem [thread:$0]  %s44, 1024, %s46, [#allocation6], 64, 64, 4
    $region17: #{tpu_custom_call.1} parent=1 // pred_fallthru
      _
    // Predicated region
    $region18: #{tpu_custom_call.1} parent=1 // pred_check
      _
    $region19: #{tpu_custom_call.1} parent=1 // pred_check_branch
      %53 = sbr.rel (0) target = $region21
    $region20: #{tpu_custom_call.1} parent=1 // pred_region
      _
    $region21: #{tpu_custom_call.1} parent=1 // pred_fallthru
      _
    // Predicated region
    $region22: #{tpu_custom_call.1} parent=1 // pred_check
      _
    $region23: #{tpu_custom_call.1} parent=1 // pred_check_branch
      %55 = sbr.rel (0) target = $region25
    $region24: #{tpu_custom_call.1} parent=1 // pred_region
      %57 = dma.done [#allocation3], 64
    $region25: #{tpu_custom_call.1} parent=1 // pred_fallthru
      _
    // Predicated region
    $region26: #{tpu_custom_call.1} parent=1 // pred_check
      _
    $region27: #{tpu_custom_call.1} parent=1 // pred_check_branch
      %59 = sbr.rel (0) target = $region29
    $region28: #{tpu_custom_call.1} parent=1 // pred_region
      %61 = dma.done [#allocation6], 1024
    $region29: #{tpu_custom_call.1} parent=1 // pred_fallthru
      _
    // Predicated region
    $region30: #{tpu_custom_call.1} parent=1 // pred_check
      _
    $region31: #{tpu_custom_call.1} parent=1 // pred_check_branch
      %63 = sbr.rel (0) target = $region33
    $region32: #{tpu_custom_call.1} parent=1 // pred_region
      %65 = dma.done [#allocation6], 1024
    $region33: #{tpu_custom_call.1} parent=1 // pred_fallthru
      _
    %v66 = vld [vmem:[#allocation2] sm:$0xf]
    %v67 = vld [vmem:[#allocation5] sm:$0xf]
    %v68 = vld [vmem:[#allocation5 + $0x4] sm:$0xf]
    %v69 = vld [vmem:[#allocation5 + $0x8] sm:$0xf]
    %v70 = vld [vmem:[#allocation5 + $0xc] sm:$0xf]
    %v71 = vld [vmem:[#allocation5 + $0x10] sm:$0xf]
    %v72 = vld [vmem:[#allocation5 + $0x14] sm:$0xf]
    %v73 = vld [vmem:[#allocation5 + $0x18] sm:$0xf]
    %v74 = vld [vmem:[#allocation5 + $0x1c] sm:$0xf]
    %v75 = vld [vmem:[#allocation5 + $0x20] sm:$0xf]
    %v76 = vld [vmem:[#allocation5 + $0x24] sm:$0xf]
    %v77 = vld [vmem:[#allocation5 + $0x28] sm:$0xf]
    %v78 = vld [vmem:[#allocation5 + $0x2c] sm:$0xf]
    %v79 = vld [vmem:[#allocation5 + $0x30] sm:$0xf]
    %v80 = vld [vmem:[#allocation5 + $0x34] sm:$0xf]
    %v81 = vld [vmem:[#allocation5 + $0x38] sm:$0xf]
    %v82 = vld [vmem:[#allocation5 + $0x3c] sm:$0xf]
    %v83 = vld [vmem:[%s2] sm:$0x1]
    %v85 = vperm.slane %v83, 0
    %v103 = vunpack.c.l.b16 %v67
    %v104 = vunpack.c.l.b16 %v68
    %v105 = vunpack.c.l.b16 %v69
    %v106 = vunpack.c.l.b16 %v70
    %v107 = vunpack.c.l.b16 %v71
    %v108 = vunpack.c.l.b16 %v72
    %v109 = vunpack.c.l.b16 %v73
    %v110 = vunpack.c.l.b16 %v74
    %v111 = vunpack.c.l.b16 %v75
    %v112 = vunpack.c.l.b16 %v76
    %v113 = vunpack.c.l.b16 %v77
    %v114 = vunpack.c.l.b16 %v78
    %v115 = vunpack.c.l.b16 %v79
    %v116 = vunpack.c.l.b16 %v80
    %v117 = vunpack.c.l.b16 %v81
    %v118 = vunpack.c.l.b16 %v82
    %v119 = vpack.c.b16 %v104, %v103
    %v120 = vpack.c.b16 %v106, %v105
    %v121 = vpack.c.b16 %v108, %v107
    %v122 = vpack.c.b16 %v110, %v109
    %v123 = vpack.c.b16 %v112, %v111
    %v124 = vpack.c.b16 %v114, %v113
    %v125 = vpack.c.b16 %v116, %v115
    %v126 = vpack.c.b16 %v118, %v117
    %135 = vmatpush.bf16.msra.mxu0 %v126
    %136 = vmatpush.bf16.msra.mxu0 %v125
    %137 = vmatpush.bf16.msra.mxu0 %v124
    %138 = vmatpush.bf16.msra.mxu0 %v123
    %139 = vmatpush.bf16.msra.mxu0 %v122
    %140 = vmatpush.bf16.msra.mxu0 %v121
    %141 = vmatpush.bf16.msra.mxu0 %v120
    %142 = vmatpush.bf16.msra.mxu0 %v119
    %143 = vmatmul.bf16.gmra.mxu0 %v66
    %v144 = vpop.f32.mrf.mxu0
    %v145 = vadd.f32 %v85, %v144
    %v146 = vpop.f32.mrf.mxu0
    %147 = vdwg.mxu0
    %v148 = vmax.f32 %v145, 0.0
    %v149 = vpack.c.bf16 %v148, %v148
    %v150 = vld [vmem:[#allocation7] sm:$0xf]
    %v151 = vld [vmem:[#allocation7 + $0x4] sm:$0xf]
    %v152 = vld [vmem:[#allocation7 + $0x8] sm:$0xf]
    %v153 = vld [vmem:[#allocation7 + $0xc] sm:$0xf]
    %v154 = vld [vmem:[#allocation7 + $0x10] sm:$0xf]
    %v155 = vld [vmem:[#allocation7 + $0x14] sm:$0xf]
    %v156 = vld [vmem:[#allocation7 + $0x18] sm:$0xf]
    %v157 = vld [vmem:[#allocation7 + $0x1c] sm:$0xf]
    %v158 = vld [vmem:[#allocation7 + $0x20] sm:$0xf]
    %v159 = vld [vmem:[#allocation7 + $0x24] sm:$0xf]
    %v160 = vld [vmem:[#allocation7 + $0x28] sm:$0xf]
    %v161 = vld [vmem:[#allocation7 + $0x2c] sm:$0xf]
    %v162 = vld [vmem:[#allocation7 + $0x30] sm:$0xf]
    %v163 = vld [vmem:[#allocation7 + $0x34] sm:$0xf]
    %v164 = vld [vmem:[#allocation7 + $0x38] sm:$0xf]
    %v165 = vld [vmem:[#allocation7 + $0x3c] sm:$0xf]
    %v166 = vld [vmem:[%s4] sm:$0x1]
    %v168 = vperm.slane %v166, 0
    %v186 = vunpack.c.l.b16 %v150
    %v187 = vunpack.c.l.b16 %v151
    %v188 = vunpack.c.l.b16 %v152
    %v189 = vunpack.c.l.b16 %v153
    %v190 = vunpack.c.l.b16 %v154
    %v191 = vunpack.c.l.b16 %v155
    %v192 = vunpack.c.l.b16 %v156
    %v193 = vunpack.c.l.b16 %v157
    %v194 = vunpack.c.l.b16 %v158
    %v195 = vunpack.c.l.b16 %v159
    %v196 = vunpack.c.l.b16 %v160
    %v197 = vunpack.c.l.b16 %v161
    %v198 = vunpack.c.l.b16 %v162
    %v199 = vunpack.c.l.b16 %v163
    %v200 = vunpack.c.l.b16 %v164
    %v201 = vunpack.c.l.b16 %v165
    %v202 = vpack.c.b16 %v187, %v186
    %v203 = vpack.c.b16 %v189, %v188
    %v204 = vpack.c.b16 %v191, %v190
    %v205 = vpack.c.b16 %v193, %v192
    %v206 = vpack.c.b16 %v195, %v194
    %v207 = vpack.c.b16 %v197, %v196
    %v208 = vpack.c.b16 %v199, %v198
    %v209 = vpack.c.b16 %v201, %v200
    %218 = vmatpush.bf16.msra.mxu0 %v209
    %219 = vmatpush.bf16.msra.mxu0 %v208
    %220 = vmatpush.bf16.msra.mxu0 %v207
    %221 = vmatpush.bf16.msra.mxu0 %v206
    %222 = vmatpush.bf16.msra.mxu0 %v205
    %223 = vmatpush.bf16.msra.mxu0 %v204
    %224 = vmatpush.bf16.msra.mxu0 %v203
    %225 = vmatpush.bf16.msra.mxu0 %v202
    %226 = vmatmul.bf16.gmra.mxu0 %v149
    %v227 = vpop.f32.mrf.mxu0
    %v228 = vadd.f32 %v168, %v227
    %v229 = vpop.f32.mrf.mxu0
    %230 = vdwg.mxu0
    %v231 = vlaneseq
    %v232 = vand.u32 %v231, 127
    %vm233 = vcmp.lt.s32.totalorder %v232, 16
    %v234 = vsel %vm233, %v228, -1e+30
    %235 = vmax.xlane.f32.xlu0 %v234
    %v236 = vpop.xlane.xlu0 %235
    %v237 = vsub.f32 %v234, %v236
    %v238 = vmul.f32 %v237, 1.442695
    %v239 = vpow.pop %v238
    %240 = vadd.xlane.f32.xlu0 %v239
    %v241 = vpop.xlane.xlu0 %240
    %v242 = vlog2.pop %v241
    %v243 = vmul.f32 %v242, 0.6931472
    %v244 = vsub.f32 %v237, %v243
    %245 = vst [vmem:[#allocation8] sm:$0xff] %v244
    // Predicated region
    $region34: #{tpu_custom_call.1} parent=1 // pred_check
      _
    $region35: #{tpu_custom_call.1} parent=1 // pred_check_branch
      %247 = sbr.rel (0) target = $region37
    $region36: #{tpu_custom_call.1} parent=1 // pred_region
      %249 = vsyncadd [#allocation4], 0
      %s251 = sshll.u32 [#allocation8], 4
      %s252 = int_to_ptr.vmem [resolvable:$true] %s251
      %s253 = sshll.u32 %s5, 4
      %s254 = int_to_ptr.hbm [resolvable:$true] %s253
      %256 = dma.vmem_to_hbm [thread:$0]  %s252, 128, %s254, [#allocation4]
    $region37: #{tpu_custom_call.1} parent=1 // pred_fallthru
      _
    // Predicated region
    $region38: #{tpu_custom_call.1} parent=1 // pred_check
      _
    $region39: #{tpu_custom_call.1} parent=1 // pred_check_branch
      %258 = sbr.rel (0) target = $region41
    $region40: #{tpu_custom_call.1} parent=1 // pred_region
      %260 = dma.done [#allocation4], 128
    $region41: #{tpu_custom_call.1} parent=1 // pred_fallthru
      _
    %261 = vsyncpa [#allocation3], 1
    %262 = vsyncpa [#allocation6], 1
    %263 = vsyncpa [#allocation4], 1

</llo_original>
